<compile_context>
chip_gen: v5e
topology: v5e:2x2
jax: 0.10.0
libtpu: 0.0.40
codegen_flags: <defaults>
</compile_context>

<pallas_src>
import jax
import jax.numpy as jnp
from jax.experimental import pallas as pl
from jax.experimental.pallas import tpu as pltpu


# ---------------------------------------------------------------------------
# Kernels
# ---------------------------------------------------------------------------

def _make_stage0_kernel(num_layers, head_dim):
    """Stage 0, on a row tile of the f32 adjacency:
         adj_q, scale = per-row int8 quantisation of adj      (fused cast, item 2/3)
         gcn          = adj_rows @ inputs_emb                  (bf16 MXU, f32 acc)
         xw0          = gcn_rows @ W0                          (hoisted layer-0 matmul)
         gcn_part_l   = gcn[:, l*hd:(l+1)*hd]                  (per-layer epilogue slabs)
    """

    def kernel(adj_ref, x_ref, w0_ref, adjq_ref, scale_ref, xw0_ref, *gcn_part_refs):
        a = adj_ref[...]                                        # (TM, Np) f32
        # Per-row symmetric int8 quantisation (adj is row-normalised -> tiny error).
        amax = jnp.max(jnp.abs(a), axis=-1, keepdims=True)      # (TM, 1)
        scale = jnp.maximum(amax, 1e-30) * (1.0 / 127.0)
        adjq_ref[...] = jnp.round(a * (1.0 / scale)).astype(jnp.int8)
        scale_ref[...] = scale

        # gcn_inputs rows = adj_rows @ inputs_emb (bf16 operands, f32 accumulation).
        g = jnp.dot(a.astype(jnp.bfloat16), x_ref[...],
                    preferred_element_type=jnp.float32)         # (TM, D) f32

        # Hoisted, grid-invariant part of layer 0: xw0 = gcn @ W0.
        xw0_ref[...] = jnp.dot(g.astype(jnp.bfloat16), w0_ref[...],
                               preferred_element_type=jnp.float32
                               ).astype(jnp.bfloat16)

        # Per-layer gcn column slabs for the fused "+ gcn_inputs" epilogue.
        for l in range(num_layers):
            gcn_part_refs[l][...] = g[:, l * head_dim:(l + 1) * head_dim]

    return kernel


def _make_layer_kernel(num_prev, has_next):
    """One GCN layer on a row tile of the int8 adjacency:
         AxW   = softmax(scale_rows * (adj_q_rows @ xw) + b)    (xw = prev @ W, hoisted)
         cols  = tanh(AxW + gcn_cols)
         xw_next = AxW @ W_{l+1,eff}                            (unless last layer)
       The last layer also concatenates the earlier layers' `cols` slabs in-kernel so the
       final (N, mem_dim) output is written lane-dense in a single store.
    """

    def kernel(*refs):
        adjq_ref, scale_ref, xw_ref, b_ref, g_ref = refs[:5]
        pos = 5
        wnext_ref = None
        if has_next:
            wnext_ref = refs[pos]
            pos += 1
        prev_out_refs = refs[pos:pos + num_prev]
        pos += num_prev
        out_ref = refs[pos]
        pos += 1
        xw_next_ref = refs[pos] if has_next else None

        adj = adjq_ref[...].astype(jnp.bfloat16)                # int8 storage, bf16 compute
        z = jnp.dot(adj, xw_ref[...], preferred_element_type=jnp.float32)   # (TM, hd)
        z = z * scale_ref[...] + b_ref[...]                     # per-row dequant + bias, f32

        # Row softmax (F.softmax default dim=1 on a 2-D tensor), all in f32.
        m = jnp.max(z, axis=-1, keepdims=True)
        e = jnp.exp(z - m)
        axw = e / jnp.sum(e, axis=-1, keepdims=True)

        cols = jnp.tanh(axw + g_ref[...])                       # fused cat-slab + add + tanh

        if has_next:
            # Hoisted, grid-invariant part of the NEXT layer: xw_{l+1} = AxW_l @ W_{l+1,eff}.
            xw_next_ref[...] = jnp.dot(axw.astype(jnp.bfloat16), wnext_ref[...],
                                       preferred_element_type=jnp.float32
                                       ).astype(jnp.bfloat16)

        if num_prev:
            out_ref[...] = jnp.concatenate(
                [r[...] for r in prev_out_refs] + [cols], axis=1)
        else:
            out_ref[...] = cols

    return kernel


# ---------------------------------------------------------------------------
# Tiling helpers
# ---------------------------------------------------------------------------

def _round_up(x, m):
    return ((x + m - 1) // m) * m


def _vmem_budget_bytes():
    """~75% of physical VMEM: 96 MiB on v5e/v6e (128 MiB), 48 MiB on v7x (64 MiB)."""
    try:
        cap = int(pltpu.get_tpu_info().vmem_capacity_bytes)
    except Exception:
        cap = 64 << 20                       # conservative (v7x-sized) fallback
    return max((cap * 3) // 4, 16 << 20)


def _pick_row_tile(n, bytes_per_row, budget, min_steps=4):
    """Largest row tile (multiple of 32, dividing padded N) whose double-buffered working
    set fits `budget`, preferring grids with >= min_steps steps (pipelining + v7x megacore)."""
    cands = [t for t in (4096, 2048, 1024, 512, 256, 128, 64, 32)
             if t <= n and n % t == 0]
    if not cands:
        return n
    for tm in cands:
        if tm * bytes_per_row <= budget and n // tm >= min_steps:
            return tm
    for tm in cands:
        if tm * bytes_per_row <= budget:
            return tm
    return cands[-1]


# ---------------------------------------------------------------------------
# Wrapper
# ---------------------------------------------------------------------------

def lsmgcn_forward(adj, inputs_emb, weights, biases, *, heads):
    """Eval-mode forward of LSMGCN / MultiGraphConvLayer.

    adj:         (N, N) dense (row-normalised) adjacency, float32.
    inputs_emb:  (N, mem_dim) float32.
    weights[l]:  (in_l, head_dim) pre-transposed nn.Linear weight (y = x @ W + b).
    biases[l]:   (1, head_dim).
    Returns (N, mem_dim) float32.

    `heads` is accepted for interface fidelity only: the reference module shares weight_list
    across the head loop and dropout is identity at eval, so every head is identical and the
    mean over heads equals a single head.
    """
    N, D = inputs_emb.shape
    if adj.shape != (N, N):
        raise ValueError("adj must be (N, N) with N == inputs_emb.shape[0]")
    L = len(weights)
    if not (1 <= L <= 3):
        raise ValueError("MultiGraphConvLayer's cat arithmetic only supports 1..3 layers")
    hd = D // L
    if hd * L != D:
        raise ValueError("mem_dim must be divisible by num_layers")
    if heads < 1:
        raise ValueError("heads must be >= 1")

    # Eval-mode fold: for l >= 2 the layer input is cat([AxW, AxW]) and
    # cat(a, a) @ W == a @ (W[:hd] + W[hd:]) -> no in-kernel concatenate ever needed.
    w_eff, b_eff = [], []
    for l, (W, b) in enumerate(zip(weights, biases)):
        W = jnp.asarray(W, jnp.float32)
        in_l = W.shape[0]
        if l == 0:
            if in_l != D:
                raise ValueError("layer-0 weight must have in_features == mem_dim")
            We = W
        elif in_l == hd:
            We = W
        elif in_l == 2 * hd:
            We = W[:hd] + W[hd:]
        else:
            raise ValueError(f"unexpected in_features={in_l} for layer {l}")
        w_eff.append(We.astype(jnp.bfloat16))
        b_eff.append(jnp.asarray(b, jnp.float32).reshape(1, hd))

    # Zero-pad the node axis to a multiple of 128: every BlockSpec tile stays legal, the
    # row grid always pipelines, and padded rows/cols are exactly inert for the real rows
    # (they are sliced away at the end).
    adj = jnp.asarray(adj, jnp.float32)
    x = jnp.asarray(inputs_emb, jnp.float32)
    Np = _round_up(max(N, 128), 128)
    if Np != N:
        adj = jnp.pad(adj, ((0, Np - N), (0, Np - N)))
        x = jnp.pad(x, ((0, Np - N), (0, 0)))
    x_bf16 = x.astype(jnp.bfloat16)

    budget = _vmem_budget_bytes()
    params = pltpu.CompilerParams(dimension_semantics=("parallel",),
                                  vmem_limit_bytes=budget)

    # --- Stage 0: stream f32 adj once -> int8 adj + row scales + gcn slabs + xw0 ---------
    resident0 = 4 * Np * D + (1 << 20)            # double-buffered bf16 inputs_emb + margin
    bpr0 = 10 * Np + 8 * D + 16 * hd + 64         # double-buffered bytes per tile row
    tm0 = _pick_row_tile(Np, bpr0, budget - resident0)

    stage0 = pl.pallas_call(
        _make_stage0_kernel(L, hd),
        out_shape=(
            jax.ShapeDtypeStruct((Np, Np), jnp.int8),      # quantised adj
            jax.ShapeDtypeStruct((Np, 1), jnp.float32),    # per-row dequant scale
            jax.ShapeDtypeStruct((Np, hd), jnp.bfloat16),  # xw0 = gcn @ W0
        ) + tuple(jax.ShapeDtypeStruct((Np, hd), jnp.float32) for _ in range(L)),
        grid=(Np // tm0,),
        in_specs=[
            pl.BlockSpec((tm0, Np), lambda r: (r, 0)),     # adj rows (streamed, f32)
            pl.BlockSpec((Np, D), lambda r: (0, 0)),       # inputs_emb (resident)
            pl.BlockSpec((D, hd), lambda r: (0, 0)),       # W0 (resident)
        ],
        out_specs=(
            pl.BlockSpec((tm0, Np), lambda r: (r, 0)),
            pl.BlockSpec((tm0, 1), lambda r: (r, 0)),
            pl.BlockSpec((tm0, hd), lambda r: (r, 0)),
        ) + tuple(pl.BlockSpec((tm0, hd), lambda r: (r, 0)) for _ in range(L)),
        compiler_params=params,
    )(adj, x_bf16, w_eff[0])

    adj_q, adj_scale, xw = stage0[0], stage0[1], stage0[2]
    gcn_parts = list(stage0[3:])

    # --- Layers 0..L-1: one pipelined call per layer; each streams int8 adj exactly once --
    resident_l = 4 * Np * hd + (1 << 20)          # double-buffered resident xw + margin
    bprl = 2 * Np + 40 * D + 64
    tml = _pick_row_tile(Np, bprl, budget - resident_l)
    gridl = (Np // tml,)

    earlier_outs = []                              # (Np, hd) f32 tanh(AxW_l + gcn_l) slabs
    final = None
    for l in range(L):
        last = (l == L - 1)
        has_next = not last
        num_prev = (L - 1) if last else 0

        in_specs = [
            pl.BlockSpec((tml, Np), lambda r: (r, 0)),     # int8 adj rows (streamed)
            pl.BlockSpec((tml, 1), lambda r: (r, 0)),      # per-row dequant scale
            pl.BlockSpec((Np, hd), lambda r: (0, 0)),      # xw_l (resident, hoisted matmul)
            pl.BlockSpec((1, hd), lambda r: (0, 0)),       # bias
            pl.BlockSpec((tml, hd), lambda r: (r, 0)),     # gcn column slab rows
        ]
        args = [adj_q, adj_scale, xw, b_eff[l], gcn_parts[l]]
        if has_next:
            in_specs.append(pl.BlockSpec((hd, hd), lambda r: (0, 0)))   # W_{l+1,eff}
            args.append(w_eff[l + 1])
        if last:
            for prev in earlier_outs:                       # earlier layers' out slabs
                in_specs.append(pl.BlockSpec((tml, hd), lambda r: (r, 0)))
                args.append(prev)

        out_width = D if last else hd
        out_shape = [jax.ShapeDtypeStruct((Np, out_width), jnp.float32)]
        out_specs = [pl.BlockSpec((tml, out_width), lambda r: (r, 0))]
        if has_next:
            out_shape.append(jax.ShapeDtypeStruct((Np, hd), jnp.bfloat16))
            out_specs.append(pl.BlockSpec((tml, hd), lambda r: (r, 0)))

        res = pl.pallas_call(
            _make_layer_kernel(num_prev, has_next),
            out_shape=tuple(out_shape),
            grid=gridl,
            in_specs=in_specs,
            out_specs=tuple(out_specs),
            compiler_params=params,
        )(*args)

        if has_next:
            out_l, xw = res
            earlier_outs.append(out_l)
        else:
            final = res[0] if isinstance(res, (tuple, list)) else res

    return final[:N]


# ---------------------------------------------------------------------------
# Pure-JAX reference (mirrors the PyTorch forward in f32, including the cat)
# ---------------------------------------------------------------------------

def _lsmgcn_reference(adj, x, weights, biases, heads):
    gcn = adj @ x
    head_list = []
    for _ in range(heads):
        outputs = gcn
        outs = []
        for l, (W, b) in enumerate(zip(weights, biases)):
            axw = (adj @ outputs) @ W + b
            axw = jax.nn.softmax(axw, axis=1)
            outputs = axw                       # dropout == identity at eval
            if l >= 1:
                outputs = jnp.concatenate([outputs, axw], axis=1)
            outs.append(axw)
        head_list.append(jnp.concatenate(outs, axis=1) + gcn)
    return jnp.tanh(jnp.mean(jnp.stack(head_list), axis=0))


# ---------------------------------------------------------------------------
# Demo
# ---------------------------------------------------------------------------

if __name__ == "__main__":
    N = 256            # graph nodes -> 4-step pipelined "parallel" row grid
    hidden_dim = 48    # mem_dim
    num_layers = 3     # exercises stage-0 hoist, middle layer, folded-cat last layer
    heads = 2
    gcn_dropout = 0.1  # identity at inference
    head_dim = hidden_dim // num_layers

    key = jax.random.PRNGKey(0)
    keys = jax.random.split(key, 2 + 2 * num_layers)
    k_adj, k_x = keys[0], keys[1]
    wkeys = keys[2:]

    # Row-normalized dense adjacency (stands in for the module's sparse adj).
    adj = jax.random.uniform(k_adj, (N, N), jnp.float32)
    adj = adj / jnp.sum(adj, axis=1, keepdims=True)
    inputs_emb = jax.random.normal(k_x, (N, hidden_dim), jnp.float32)

    # nn.Linear-style init: U(-1/sqrt(in), 1/sqrt(in)); weights pre-transposed (in, out).
    in_dims = [hidden_dim] + [head_dim * j for j in range(1, num_layers)]
    weights, biases = [], []
    for l in range(num_layers):
        bound = float(in_dims[l]) ** -0.5
        W = jax.random.uniform(wkeys[2 * l], (in_dims[l], head_dim),
                               jnp.float32, -bound, bound)
        b = jax.random.uniform(wkeys[2 * l + 1], (1, head_dim),
                               jnp.float32, -bound, bound)
        weights.append(W)
        biases.append(b)

    out = lsmgcn_forward(adj, inputs_emb, weights, biases, heads=heads)
    out = jax.block_until_ready(out)
    assert out.shape == (N, hidden_dim)
    assert bool(jnp.all(jnp.isfinite(out)))

    # Loose tolerance: kernel uses bf16 MXU operands + per-row int8 adj for the layer
    # propagations; reference is pure f32.
    ref = _lsmgcn_reference(adj, inputs_emb, weights, biases, heads)
    max_err = float(jnp.max(jnp.abs(out - ref)))
    assert max_err < 5e-2, f"max abs error vs f32 reference: {max_err}"

    print("KERNEL_OK")
</pallas_src>

<mosaic_0001>
module attributes {stable_mosaic.version = 11 : i64} {
  func.func @kernel(%arg0: i32, %arg1: memref<64x256xf32, #tpu.memory_space<vmem>>, %arg2: memref<256x48xbf16, #tpu.memory_space<vmem>>, %arg3: memref<48x16xbf16, #tpu.memory_space<vmem>>, %arg4: memref<64x256xi8, #tpu.memory_space<vmem>>, %arg5: memref<64x1xf32, #tpu.memory_space<vmem>>, %arg6: memref<64x16xbf16, #tpu.memory_space<vmem>>, %arg7: memref<64x16xf32, #tpu.memory_space<vmem>>, %arg8: memref<64x16xf32, #tpu.memory_space<vmem>>, %arg9: memref<64x16xf32, #tpu.memory_space<vmem>>) attributes {dimension_semantics = [#tpu.dimension_semantics<parallel>], iteration_bounds = array<i64: 4>, scalar_prefetch = 0 : i64, scratch_operands = 0 : i64, tpu.core_type = #tpu.core_type<tc>, window_params = [{transform_indices = @transform_0, window_bounds = array<i64: 64, 256>}, {pipeline_mode = #tpu.pipeline_mode<synchronous>, transform_indices = @transform_1, window_bounds = array<i64: 256, 48>}, {pipeline_mode = #tpu.pipeline_mode<synchronous>, transform_indices = @transform_2, window_bounds = array<i64: 48, 16>}, {transform_indices = @transform_3, window_bounds = array<i64: 64, 256>}, {transform_indices = @transform_4, window_bounds = array<i64: 64, 1>}, {transform_indices = @transform_5, window_bounds = array<i64: 64, 16>}, {transform_indices = @transform_6, window_bounds = array<i64: 64, 16>}, {transform_indices = @transform_7, window_bounds = array<i64: 64, 16>}, {transform_indices = @transform_8, window_bounds = array<i64: 64, 16>}]} {
    %c0 = arith.constant 0 : index
    %c0_0 = arith.constant 0 : index
    %0 = vector.load %arg1[%c0, %c0_0] : memref<64x256xf32, #tpu.memory_space<vmem>>, vector<64x256xf32>
    %1 = math.absf %0 : vector<64x256xf32>
    %cst = arith.constant dense<0xFF800000> : vector<64xf32>
    %2 = vector.multi_reduction <maximumf>, %1, %cst [1] : vector<64x256xf32> to vector<64xf32>
    %3 = vector.shape_cast %2 : vector<64xf32> to vector<64x1xf32>
    %cst_1 = arith.constant 1.000000e-30 : f32
    %4 = vector.broadcast %cst_1 : f32 to vector<64x1xf32>
    %5 = arith.maximumf %3, %4 : vector<64x1xf32>
    %cst_2 = arith.constant 0.00787401571 : f32
    %6 = vector.broadcast %cst_2 : f32 to vector<64x1xf32>
    %7 = arith.mulf %5, %6 : vector<64x1xf32>
    %cst_3 = arith.constant 1.000000e+00 : f32
    %8 = vector.broadcast %cst_3 : f32 to vector<64x1xf32>
    %9 = arith.divf %8, %7 : vector<64x1xf32>
    %10 = vector.broadcast %9 : vector<64x1xf32> to vector<64x256xf32>
    %11 = arith.mulf %0, %10 : vector<64x256xf32>
    %12 = math.roundeven %11 : vector<64x256xf32>
    %13 = arith.fptosi %12 : vector<64x256xf32> to vector<64x256xi8>
    %c0_4 = arith.constant 0 : index
    %c0_5 = arith.constant 0 : index
    %14 = vector.load %arg4[%c0_4, %c0_5] : memref<64x256xi8, #tpu.memory_space<vmem>>, vector<64x256xi8>
    tpu.vector_store %arg4[%c0_4, %c0_5], %13 {strides = array<i32>} : memref<64x256xi8, #tpu.memory_space<vmem>>, vector<64x256xi8>,
    %c0_6 = arith.constant 0 : index
    %c0_7 = arith.constant 0 : index
    %15 = vector.load %arg5[%c0_6, %c0_7] : memref<64x1xf32, #tpu.memory_space<vmem>>, vector<64x1xf32>
    tpu.vector_store %arg5[%c0_6, %c0_7], %7 {strides = array<i32>} : memref<64x1xf32, #tpu.memory_space<vmem>>, vector<64x1xf32>,
    %16 = arith.truncf %0 : vector<64x256xf32> to vector<64x256xbf16>
    %c0_8 = arith.constant 0 : index
    %c0_9 = arith.constant 0 : index
    %17 = vector.load %arg2[%c0_8, %c0_9] : memref<256x48xbf16, #tpu.memory_space<vmem>>, vector<256x48xbf16>
    %cst_10 = arith.constant dense<0.000000e+00> : vector<64x48xf32>
    %18 = tpu.matmul %16, %17, %cst_10 {dimension_numbers = #tpu.dot_dimension_numbers<[1], [0], [0], [1], [0, 0, 1, 1], [], []>} : vector<64x256xbf16>, vector<256x48xbf16>, vector<64x48xf32> -> vector<64x48xf32>
    %19 = arith.truncf %18 : vector<64x48xf32> to vector<64x48xbf16>
    %c0_11 = arith.constant 0 : index
    %c0_12 = arith.constant 0 : index
    %20 = vector.load %arg3[%c0_11, %c0_12] : memref<48x16xbf16, #tpu.memory_space<vmem>>, vector<48x16xbf16>
    %cst_13 = arith.constant dense<0.000000e+00> : vector<64x16xf32>
    %21 = tpu.matmul %19, %20, %cst_13 {dimension_numbers = #tpu.dot_dimension_numbers<[1], [0], [0], [1], [0, 0, 1, 1], [], []>} : vector<64x48xbf16>, vector<48x16xbf16>, vector<64x16xf32> -> vector<64x16xf32>
    %22 = arith.truncf %21 : vector<64x16xf32> to vector<64x16xbf16>
    %c0_14 = arith.constant 0 : index
    %c0_15 = arith.constant 0 : index
    %23 = vector.load %arg6[%c0_14, %c0_15] : memref<64x16xbf16, #tpu.memory_space<vmem>>, vector<64x16xbf16>
    tpu.vector_store %arg6[%c0_14, %c0_15], %22 {strides = array<i32>} : memref<64x16xbf16, #tpu.memory_space<vmem>>, vector<64x16xbf16>,
    %24 = vector.extract_strided_slice %18 {offsets = [0, 0], sizes = [64, 16], strides = [1, 1]} : vector<64x48xf32> to vector<64x16xf32>
    %c0_16 = arith.constant 0 : index
    %c0_17 = arith.constant 0 : index
    %25 = vector.load %arg7[%c0_16, %c0_17] : memref<64x16xf32, #tpu.memory_space<vmem>>, vector<64x16xf32>
    tpu.vector_store %arg7[%c0_16, %c0_17], %24 {strides = array<i32>} : memref<64x16xf32, #tpu.memory_space<vmem>>, vector<64x16xf32>,
    %26 = vector.extract_strided_slice %18 {offsets = [0, 16], sizes = [64, 16], strides = [1, 1]} : vector<64x48xf32> to vector<64x16xf32>
    %c0_18 = arith.constant 0 : index
    %c0_19 = arith.constant 0 : index
    %27 = vector.load %arg8[%c0_18, %c0_19] : memref<64x16xf32, #tpu.memory_space<vmem>>, vector<64x16xf32>
    tpu.vector_store %arg8[%c0_18, %c0_19], %26 {strides = array<i32>} : memref<64x16xf32, #tpu.memory_space<vmem>>, vector<64x16xf32>,
    %28 = vector.extract_strided_slice %18 {offsets = [0, 32], sizes = [64, 16], strides = [1, 1]} : vector<64x48xf32> to vector<64x16xf32>
    %c0_20 = arith.constant 0 : index
    %c0_21 = arith.constant 0 : index
    %29 = vector.load %arg9[%c0_20, %c0_21] : memref<64x16xf32, #tpu.memory_space<vmem>>, vector<64x16xf32>
    tpu.vector_store %arg9[%c0_20, %c0_21], %28 {strides = array<i32>} : memref<64x16xf32, #tpu.memory_space<vmem>>, vector<64x16xf32>,
    return
  }
  func.func @transform_0(%arg0: i32) -> (i32, i32) {
    %c0_i32 = arith.constant 0 : i32
    %c0_i32_0 = arith.constant 0 : i32
    return %arg0, %c0_i32 : i32, i32
  }
  func.func @transform_1(%arg0: i32) -> (i32, i32) {
    %c0_i32 = arith.constant 0 : i32
    %c0_i32_0 = arith.constant 0 : i32
    %c0_i32_1 = arith.constant 0 : i32
    return %c0_i32, %c0_i32_0 : i32, i32
  }
  func.func @transform_2(%arg0: i32) -> (i32, i32) {
    %c0_i32 = arith.constant 0 : i32
    %c0_i32_0 = arith.constant 0 : i32
    %c0_i32_1 = arith.constant 0 : i32
    return %c0_i32, %c0_i32_0 : i32, i32
  }
  func.func @transform_3(%arg0: i32) -> (i32, i32) {
    %c0_i32 = arith.constant 0 : i32
    %c0_i32_0 = arith.constant 0 : i32
    return %arg0, %c0_i32 : i32, i32
  }
  func.func @transform_4(%arg0: i32) -> (i32, i32) {
    %c0_i32 = arith.constant 0 : i32
    %c0_i32_0 = arith.constant 0 : i32
    return %arg0, %c0_i32 : i32, i32
  }
  func.func @transform_5(%arg0: i32) -> (i32, i32) {
    %c0_i32 = arith.constant 0 : i32
    %c0_i32_0 = arith.constant 0 : i32
    return %arg0, %c0_i32 : i32, i32
  }
  func.func @transform_6(%arg0: i32) -> (i32, i32) {
    %c0_i32 = arith.constant 0 : i32
    %c0_i32_0 = arith.constant 0 : i32
    return %arg0, %c0_i32 : i32, i32
  }
  func.func @transform_7(%arg0: i32) -> (i32, i32) {
    %c0_i32 = arith.constant 0 : i32
    %c0_i32_0 = arith.constant 0 : i32
    return %arg0, %c0_i32 : i32, i32
  }
  func.func @transform_8(%arg0: i32) -> (i32, i32) {
    %c0_i32 = arith.constant 0 : i32
    %c0_i32_0 = arith.constant 0 : i32
    return %arg0, %c0_i32 : i32, i32
  }
}

</mosaic_0001>

<llo_original>
// kernel: tpu_custom_call.1
$region0: #{tpu_custom_call.1}
  #allocation0 [shape = 'u32[]', space=smem, size = 0x4, offset = 0x4, fixed_abs, tag = 'smem constant byte address 0x4 - core index']
  #allocation1 [shape = 'u32[72,128]{1,0:T(1,128)}', space=vmem, size = 0x9000, scoped, tag = 'internal scratch']
  %s0 = inlined_call_operand.hbm [shape: f32[256,256], index: 0, kind: input, shape index: {}]
  %s1 = inlined_call_operand.vmem [shape: bf16[256,48], index: 1, kind: input, shape index: {}]
  %s2 = inlined_call_operand.vmem [shape: bf16[48,16], index: 2, kind: input, shape index: {}]
  %s3 = inlined_call_operand.hbm [shape: s8[256,256], index: 3, kind: output, shape index: {0}]
  %s4 = inlined_call_operand.vmem [shape: f32[256,1], index: 4, kind: output, shape index: {1}]
  %s5 = inlined_call_operand.vmem [shape: bf16[256,16], index: 5, kind: output, shape index: {2}]
  %s6 = inlined_call_operand.vmem [shape: f32[256,16], index: 6, kind: output, shape index: {3}]
  %s7 = inlined_call_operand.vmem [shape: f32[256,16], index: 7, kind: output, shape index: {4}]
  %s8 = inlined_call_operand.vmem [shape: f32[256,16], index: 8, kind: output, shape index: {5}]
  %9 = xla_tuple %s3, %s4, %s5, %s6, %s7, %s8
  %s10 = sld [smem:[#allocation0]]
  $region89: #{tpu_custom_call.1} parent=0
    _
  %s12 = ssub.s32 1, %s10
  %s13 = scalar_select 0, %s12, %s10
  $region1: #{tpu_custom_call.1} parent=0
    #allocation2 [shape = 'u8[131072]{0}', space=vmem, size = 0x20000, scoped, tag = 'input window, operand 0']
    #allocation3 [shape = 's32[2]{0}', space=sflag, size = 0x8, scoped, tag = 'scoped memory for tpu_custom_call.1']
    #allocation4 [shape = 's32[2]{0}', space=sflag, size = 0x8, scoped, tag = 'scoped memory for tpu_custom_call.1']
    #allocation5 [shape = 'u8[32768]{0}', space=vmem, size = 0x8000, scoped, tag = 'output window, operand 0']
    %14 = vsyncpa [#allocation3], 0
    %s15 = scalar_lea.sflag [#allocation3], 1
    %16 = vsyncpa %s15, 0
    %17 = vsyncpa [#allocation4], 0
    %s18 = scalar_lea.sflag [#allocation4], 1
    %19 = vsyncpa %s18, 0
    loop: start=0, step=1, limit=6
    $region2: #{tpu_custom_call.1} parent=1 // loop_pre_header
      _
    $region3: #{tpu_custom_call.1} parent=1 // loop_header
      %s21 = sphi 0, %s25
      %p22 = scmp.ge.s32.totalorder %s21, 6
      %s31 = sphi 0, %s33
      %s34 = sphi 0, %s31
      %s35 = sphi 0, %s34
      %s51 = sphi 0, %s35
      %s55 = sphi 0, %s55
      %s57 = sphi 0, %s55
      %s58 = sphi 0, %s57
      %s72 = sphi 0, %s58
      %s76 = sphi 0, %s76
      %s78 = sphi 0, %s76
      %s79 = sphi 0, %s78
      %s93 = sphi 0, %s79
      %s99 = sphi 0, %s101
      %s102 = sphi 0, %s99
      %s103 = sphi 0, %s102
      %s119 = sphi 0, %s103
      %s125 = sphi 0, %s127
      %s128 = sphi 0, %s125
      %s129 = sphi 0, %s128
      %s145 = sphi 0, %s129
      %s151 = sphi 0, %s153
      %s154 = sphi 0, %s151
      %s155 = sphi 0, %s154
      %s171 = sphi 0, %s155
      %s177 = sphi 0, %s179
      %s180 = sphi 0, %s177
      %s181 = sphi 0, %s180
      %s197 = sphi 0, %s181
      %s203 = sphi 0, %s205
      %s206 = sphi 0, %s203
      %s207 = sphi 0, %s206
      %s223 = sphi 0, %s207
      %s229 = sphi 0, %s231
      %s232 = sphi 0, %s229
      %s233 = sphi 0, %s232
      %s249 = sphi 0, %s233
    $region4: #{tpu_custom_call.1} parent=1 // loop_header_branch
      %24 = sbr.rel (%p22) target = $region8
    $region5: #{tpu_custom_call.1} parent=1 // loop_body
      %s26 = ssub.s32 %s21, 1
      %s27 = ssub.s32 %s21, 2
      %s28 = sadd.s32 %s21, 1
      %s29 = ssub.s32 %s21, %s28
      %p30 = scmp.eq.s32.totalorder %s29, 0
      %s32 = sadd.s32 %s31, 1
      %s33 = scalar_select %p30, %s31, %s32
      %p36 = pneg %p30
      %p37 = scmp.eq.s32.totalorder %s21, 3
      %p38 = por %p36, %p37
      %p39 = scmp.ne.s32.totalorder %s31, %s34
      %p40 = scmp.eq.s32.totalorder %s21, 0
      %p41 = por %p39, %p40
      %p42 = scmp.ne.s32.totalorder %s31, %s34
      %p43 = scmp.eq.s32.totalorder %s26, 3
      %p44 = por %p42, %p43
      %p45 = scmp.ne.s32.totalorder %s34, %s35
      %p46 = scmp.eq.s32.totalorder %s26, 0
      %p47 = por %p45, %p46
      %p48 = scmp.ne.s32.totalorder %s34, %s35
      %p49 = scmp.eq.s32.totalorder %s27, 3
      %p50 = por %p48, %p49
      %p52 = scmp.ne.s32.totalorder %s35, %s51
      %p53 = scmp.eq.s32.totalorder %s27, 0
      %p54 = por %p52, %p53
      %s56 = sadd.s32 %s55, 1
      %p59 = scmp.eq.s32.totalorder %s21, 3
      %p60 = scmp.ne.s32.totalorder %s55, %s57
      %p61 = scmp.eq.s32.totalorder %s21, 0
      %p62 = por %p60, %p61
      %p63 = scmp.ne.s32.totalorder %s55, %s57
      %p64 = scmp.eq.s32.totalorder %s26, 3
      %p65 = por %p63, %p64
      %p66 = scmp.ne.s32.totalorder %s57, %s58
      %p67 = scmp.eq.s32.totalorder %s26, 0
      %p68 = por %p66, %p67
      %p69 = scmp.ne.s32.totalorder %s57, %s58
      %p70 = scmp.eq.s32.totalorder %s27, 3
      %p71 = por %p69, %p70
      %p73 = scmp.ne.s32.totalorder %s58, %s72
      %p74 = scmp.eq.s32.totalorder %s27, 0
      %p75 = por %p73, %p74
      %s77 = sadd.s32 %s76, 1
      %p80 = scmp.eq.s32.totalorder %s21, 3
      %p81 = scmp.ne.s32.totalorder %s76, %s78
      %p82 = scmp.eq.s32.totalorder %s21, 0
      %p83 = por %p81, %p82
      %p84 = scmp.ne.s32.totalorder %s76, %s78
      %p85 = scmp.eq.s32.totalorder %s26, 3
      %p86 = por %p84, %p85
      %p87 = scmp.ne.s32.totalorder %s78, %s79
      %p88 = scmp.eq.s32.totalorder %s26, 0
      %p89 = por %p87, %p88
      %p90 = scmp.ne.s32.totalorder %s78, %s79
      %p91 = scmp.eq.s32.totalorder %s27, 3
      %p92 = por %p90, %p91
      %p94 = scmp.ne.s32.totalorder %s79, %s93
      %p95 = scmp.eq.s32.totalorder %s27, 0
      %p96 = por %p94, %p95
      %s97 = ssub.s32 %s21, %s28
      %p98 = scmp.eq.s32.totalorder %s97, 0
      %s100 = sadd.s32 %s99, 1
      %s101 = scalar_select %p98, %s99, %s100
      %p104 = pneg %p98
      %p105 = scmp.eq.s32.totalorder %s21, 3
      %p106 = por %p104, %p105
      %p107 = scmp.ne.s32.totalorder %s99, %s102
      %p108 = scmp.eq.s32.totalorder %s21, 0
      %p109 = por %p107, %p108
      %p110 = scmp.ne.s32.totalorder %s99, %s102
      %p111 = scmp.eq.s32.totalorder %s26, 3
      %p112 = por %p110, %p111
      %p113 = scmp.ne.s32.totalorder %s102, %s103
      %p114 = scmp.eq.s32.totalorder %s26, 0
      %p115 = por %p113, %p114
      %p116 = scmp.ne.s32.totalorder %s102, %s103
      %p117 = scmp.eq.s32.totalorder %s27, 3
      %p118 = por %p116, %p117
      %p120 = scmp.ne.s32.totalorder %s103, %s119
      %p121 = scmp.eq.s32.totalorder %s27, 0
      %p122 = por %p120, %p121
      %s123 = ssub.s32 %s21, %s28
      %p124 = scmp.eq.s32.totalorder %s123, 0
      %s126 = sadd.s32 %s125, 1
      %s127 = scalar_select %p124, %s125, %s126
      %p130 = pneg %p124
      %p131 = scmp.eq.s32.totalorder %s21, 3
      %p132 = por %p130, %p131
      %p133 = scmp.ne.s32.totalorder %s125, %s128
      %p134 = scmp.eq.s32.totalorder %s21, 0
      %p135 = por %p133, %p134
      %p136 = scmp.ne.s32.totalorder %s125, %s128
      %p137 = scmp.eq.s32.totalorder %s26, 3
      %p138 = por %p136, %p137
      %p139 = scmp.ne.s32.totalorder %s128, %s129
      %p140 = scmp.eq.s32.totalorder %s26, 0
      %p141 = por %p139, %p140
      %p142 = scmp.ne.s32.totalorder %s128, %s129
      %p143 = scmp.eq.s32.totalorder %s27, 3
      %p144 = por %p142, %p143
      %p146 = scmp.ne.s32.totalorder %s129, %s145
      %p147 = scmp.eq.s32.totalorder %s27, 0
      %p148 = por %p146, %p147
      %s149 = ssub.s32 %s21, %s28
      %p150 = scmp.eq.s32.totalorder %s149, 0
      %s152 = sadd.s32 %s151, 1
      %s153 = scalar_select %p150, %s151, %s152
      %p156 = pneg %p150
      %p157 = scmp.eq.s32.totalorder %s21, 3
      %p158 = por %p156, %p157
      %p159 = scmp.ne.s32.totalorder %s151, %s154
      %p160 = scmp.eq.s32.totalorder %s21, 0
      %p161 = por %p159, %p160
      %p162 = scmp.ne.s32.totalorder %s151, %s154
      %p163 = scmp.eq.s32.totalorder %s26, 3
      %p164 = por %p162, %p163
      %p165 = scmp.ne.s32.totalorder %s154, %s155
      %p166 = scmp.eq.s32.totalorder %s26, 0
      %p167 = por %p165, %p166
      %p168 = scmp.ne.s32.totalorder %s154, %s155
      %p169 = scmp.eq.s32.totalorder %s27, 3
      %p170 = por %p168, %p169
      %p172 = scmp.ne.s32.totalorder %s155, %s171
      %p173 = scmp.eq.s32.totalorder %s27, 0
      %p174 = por %p172, %p173
      %s175 = ssub.s32 %s21, %s28
      %p176 = scmp.eq.s32.totalorder %s175, 0
      %s178 = sadd.s32 %s177, 1
      %s179 = scalar_select %p176, %s177, %s178
      %p182 = pneg %p176
      %p183 = scmp.eq.s32.totalorder %s21, 3
      %p184 = por %p182, %p183
      %p185 = scmp.ne.s32.totalorder %s177, %s180
      %p186 = scmp.eq.s32.totalorder %s21, 0
      %p187 = por %p185, %p186
      %p188 = scmp.ne.s32.totalorder %s177, %s180
      %p189 = scmp.eq.s32.totalorder %s26, 3
      %p190 = por %p188, %p189
      %p191 = scmp.ne.s32.totalorder %s180, %s181
      %p192 = scmp.eq.s32.totalorder %s26, 0
      %p193 = por %p191, %p192
      %p194 = scmp.ne.s32.totalorder %s180, %s181
      %p195 = scmp.eq.s32.totalorder %s27, 3
      %p196 = por %p194, %p195
      %p198 = scmp.ne.s32.totalorder %s181, %s197
      %p199 = scmp.eq.s32.totalorder %s27, 0
      %p200 = por %p198, %p199
      %s201 = ssub.s32 %s21, %s28
      %p202 = scmp.eq.s32.totalorder %s201, 0
      %s204 = sadd.s32 %s203, 1
      %s205 = scalar_select %p202, %s203, %s204
      %p208 = pneg %p202
      %p209 = scmp.eq.s32.totalorder %s21, 3
      %p210 = por %p208, %p209
      %p211 = scmp.ne.s32.totalorder %s203, %s206
      %p212 = scmp.eq.s32.totalorder %s21, 0
      %p213 = por %p211, %p212
      %p214 = scmp.ne.s32.totalorder %s203, %s206
      %p215 = scmp.eq.s32.totalorder %s26, 3
      %p216 = por %p214, %p215
      %p217 = scmp.ne.s32.totalorder %s206, %s207
      %p218 = scmp.eq.s32.totalorder %s26, 0
      %p219 = por %p217, %p218
      %p220 = scmp.ne.s32.totalorder %s206, %s207
      %p221 = scmp.eq.s32.totalorder %s27, 3
      %p222 = por %p220, %p221
      %p224 = scmp.ne.s32.totalorder %s207, %s223
      %p225 = scmp.eq.s32.totalorder %s27, 0
      %p226 = por %p224, %p225
      %s227 = ssub.s32 %s21, %s28
      %p228 = scmp.eq.s32.totalorder %s227, 0
      %s230 = sadd.s32 %s229, 1
      %s231 = scalar_select %p228, %s229, %s230
      %p234 = pneg %p228
      %p235 = scmp.eq.s32.totalorder %s21, 3
      %p236 = por %p234, %p235
      %p237 = scmp.ne.s32.totalorder %s229, %s232
      %p238 = scmp.eq.s32.totalorder %s21, 0
      %p239 = por %p237, %p238
      %p240 = scmp.ne.s32.totalorder %s229, %s232
      %p241 = scmp.eq.s32.totalorder %s26, 3
      %p242 = por %p240, %p241
      %p243 = scmp.ne.s32.totalorder %s232, %s233
      %p244 = scmp.eq.s32.totalorder %s26, 0
      %p245 = por %p243, %p244
      %p246 = scmp.ne.s32.totalorder %s232, %s233
      %p247 = scmp.eq.s32.totalorder %s27, 3
      %p248 = por %p246, %p247
      %p250 = scmp.ne.s32.totalorder %s233, %s249
      %p251 = scmp.eq.s32.totalorder %s27, 0
      %p252 = por %p250, %p251
      %p253 = scmp.le.s32.totalorder 1, %s21
      %p254 = scmp.lt.s32.totalorder %s21, 5
      %p255 = pnand %p253, %p254
      %p256 = pneg %p255
      // Predicated region
      $region9: #{tpu_custom_call.1} parent=5 // pred_check
        _
      $region10: #{tpu_custom_call.1} parent=5 // pred_check_branch
        %258 = sbr.rel (%p255) target = $region12
      $region11: #{tpu_custom_call.1} parent=5 // pred_region
        %s259 = ssub.s32 %s21, 1
        // Predicated region
        $region13: #{tpu_custom_call.1} parent=11 // pred_check
          %p260 = pneg %p68
        $region14: #{tpu_custom_call.1} parent=11 // pred_check_branch
          %262 = sbr.rel (%p260) target = $region16
        $region15: #{tpu_custom_call.1} parent=11 // pred_region
          _
        $region16: #{tpu_custom_call.1} parent=11 // pred_fallthru
          _
        // Predicated region
        $region17: #{tpu_custom_call.1} parent=11 // pred_check
          %p263 = pneg %p89
        $region18: #{tpu_custom_call.1} parent=11 // pred_check_branch
          %265 = sbr.rel (%p263) target = $region20
        $region19: #{tpu_custom_call.1} parent=11 // pred_region
          _
        $region20: #{tpu_custom_call.1} parent=11 // pred_fallthru
          _
      $region12: #{tpu_custom_call.1} parent=5 // pred_fallthru
        _
      %p266 = scmp.lt.s32.totalorder %s21, 4
      // Predicated region
      $region21: #{tpu_custom_call.1} parent=5 // pred_check
        %p267 = pneg %p266
      $region22: #{tpu_custom_call.1} parent=5 // pred_check_branch
        %269 = sbr.rel (%p267) target = $region24
      $region23: #{tpu_custom_call.1} parent=5 // pred_region
        // Predicated region
        $region25: #{tpu_custom_call.1} parent=23 // pred_check
          %p270 = pneg %p41
        $region26: #{tpu_custom_call.1} parent=23 // pred_check_branch
          %272 = sbr.rel (%p270) target = $region28
        $region27: #{tpu_custom_call.1} parent=23 // pred_region
          %s273 = sand.u32 %s31, 1
          %s274 = scalar_lea.sflag [#allocation3], %s273
          %s275 = sand.u32 %s31, 1
          %s276 = smul.addr %s275, 128
          %s277 = scalar_lea.vmem [#allocation2], %s276
          %s278 = smul.u32 8, %s21
          %280 = vsyncadd %s274, 0
          %s281 = smul.addr %s278, 2
          %s282 = smul.addr %s281, 8
          %s283 = scalar_lea.hbm %s0, %s282
          %s284 = sshll.u32 %s283, 4
          %s285 = int_to_ptr.hbm [resolvable:$true] %s284
          %s286 = sshll.u32 %s277, 4
          %s287 = int_to_ptr.vmem [resolvable:$true] %s286
          %292 = dma.hbm_to_vmem [thread:$0]  %s285, 2048, %s287, %s274, 256, 256, 16
        $region28: #{tpu_custom_call.1} parent=23 // pred_fallthru
          _
      $region24: #{tpu_custom_call.1} parent=5 // pred_fallthru
        _
      %p293 = scmp.le.s32.totalorder 1, %s21
      %p294 = scmp.lt.s32.totalorder %s21, 5
      %p295 = pnand %p293, %p294
      %p296 = pneg %p295
      // Predicated region
      $region29: #{tpu_custom_call.1} parent=5 // pred_check
        _
      $region30: #{tpu_custom_call.1} parent=5 // pred_check_branch
        %298 = sbr.rel (%p295) target = $region32
      $region31: #{tpu_custom_call.1} parent=5 // pred_region
        %s299 = ssub.s32 %s21, 1
        %s300 = sand.u32 %s34, 1
        %s301 = scalar_lea.sflag [#allocation3], %s300
        %s302 = sand.u32 %s34, 1
        %s303 = smul.addr %s302, 128
        %s304 = scalar_lea.vmem [#allocation2], %s303
        // Predicated region
        $region33: #{tpu_custom_call.1} parent=31 // pred_check
          %p305 = pneg %p47
        $region34: #{tpu_custom_call.1} parent=31 // pred_check_branch
          %307 = sbr.rel (%p305) target = $region36
        $region35: #{tpu_custom_call.1} parent=31 // pred_region
          %309 = dma.done %s301, 2048
        $region36: #{tpu_custom_call.1} parent=31 // pred_fallthru
          _
        %s310 = sand.u32 %s34, 1
        %s311 = scalar_lea.sflag [#allocation3], %s310
        %s312 = sand.u32 %s34, 1
        %s313 = smul.addr %s312, 128
        %s314 = scalar_lea.vmem [#allocation2], %s313
        %p315 = pneg %p47
        %p316 = pneg %p44
        %p317 = pneg %p68
        %p318 = pneg %p65
        %p319 = pneg %p89
        %p320 = pneg %p86
        %p321 = pneg %p115
        %p322 = pneg %p112
        %s323 = sand.u32 %s102, 1
        %s324 = scalar_lea.sflag [#allocation4], %s323
        %s325 = sand.u32 %s102, 1
        %s326 = smul.addr %s325, 32
        %s327 = scalar_lea.vmem [#allocation5], %s326
        %p328 = pneg %p141
        %p329 = pneg %p138
        %s330 = smul.u32 8, %s26
        %p331 = scmp.lt.s32.totalorder %s330, 31
        %s332 = scalar_select %p331, %s330, 31
        %s333 = smul.addr %s332, 8
        %s334 = scalar_lea.vmem %s4, %s333
        %p335 = pneg %p167
        %p336 = pneg %p164
        %s337 = smul.u32 8, %s26
        %p338 = scmp.lt.s32.totalorder %s337, 31
        %s339 = scalar_select %p338, %s337, 31
        %s340 = smul.addr %s339, 4
        %s341 = scalar_lea.vmem %s5, %s340
        %p342 = pneg %p193
        %p343 = pneg %p190
        %s344 = smul.u32 8, %s26
        %p345 = scmp.lt.s32.totalorder %s344, 31
        %s346 = scalar_select %p345, %s344, 31
        %s347 = smul.addr %s346, 8
        %s348 = scalar_lea.vmem %s6, %s347
        %p349 = pneg %p219
        %p350 = pneg %p216
        %s351 = smul.u32 8, %s26
        %p352 = scmp.lt.s32.totalorder %s351, 31
        %s353 = scalar_select %p352, %s351, 31
        %s354 = smul.addr %s353, 8
        %s355 = scalar_lea.vmem %s7, %s354
        %p356 = pneg %p245
        %p357 = pneg %p242
        %s358 = smul.u32 8, %s26
        %p359 = scmp.lt.s32.totalorder %s358, 31
        %s360 = scalar_select %p359, %s358, 31
        %s361 = smul.addr %s360, 8
        %s362 = scalar_lea.vmem %s8, %s361
        %s363 = smul.u32 8, %s26
        %s364 = smul.u32 2, %s26
        %s365 = smul.u32 8, %s26
        %p366 = scmp.lt.s32.totalorder %s365, 31
        %s367 = scalar_select %p366, %s365, 31
        %s368 = smul.addr %s367, 8
        %s369 = scalar_lea.vmem %s4, %s368
        %s370 = smul.u32 8, %s26
        %s371 = smul.u32 8, %s26
        %p372 = scmp.lt.s32.totalorder %s371, 31
        %s373 = scalar_select %p372, %s371, 31
        %s374 = smul.addr %s373, 4
        %s375 = scalar_lea.vmem %s5, %s374
        %s376 = smul.u32 8, %s26
        %s377 = smul.u32 8, %s26
        %p378 = scmp.lt.s32.totalorder %s377, 31
        %s379 = scalar_select %p378, %s377, 31
        %s380 = smul.addr %s379, 8
        %s381 = scalar_lea.vmem %s6, %s380
        %s382 = smul.u32 8, %s26
        %s383 = smul.u32 8, %s26
        %p384 = scmp.lt.s32.totalorder %s383, 31
        %s385 = scalar_select %p384, %s383, 31
        %s386 = smul.addr %s385, 8
        %s387 = scalar_lea.vmem %s7, %s386
        %s388 = smul.u32 8, %s26
        %s389 = smul.u32 8, %s26
        %p390 = scmp.lt.s32.totalorder %s389, 31
        %s391 = scalar_select %p390, %s389, 31
        %s392 = smul.addr %s391, 8
        %s393 = scalar_lea.vmem %s8, %s392
        %s394 = smul.u32 8, %s26
        %v396 = vld [vmem:[%s304] sm:$0xff]
        %v397 = vld [vmem:[%s304 + $0x8] sm:$0xff]
        %v398 = vld [vmem:[%s304 + $0x10] sm:$0xff]
        %v399 = vld [vmem:[%s304 + $0x18] sm:$0xff]
        %v400 = vld [vmem:[%s304 + $0x20] sm:$0xff]
        %v401 = vld [vmem:[%s304 + $0x28] sm:$0xff]
        %v402 = vld [vmem:[%s304 + $0x30] sm:$0xff]
        %v403 = vld [vmem:[%s304 + $0x38] sm:$0xff]
        %v404 = vld [vmem:[%s304 + $0x40] sm:$0xff]
        %v405 = vld [vmem:[%s304 + $0x48] sm:$0xff]
        %v406 = vld [vmem:[%s304 + $0x50] sm:$0xff]
        %v407 = vld [vmem:[%s304 + $0x58] sm:$0xff]
        %v408 = vld [vmem:[%s304 + $0x60] sm:$0xff]
        %v409 = vld [vmem:[%s304 + $0x68] sm:$0xff]
        %v410 = vld [vmem:[%s304 + $0x70] sm:$0xff]
        %v411 = vld [vmem:[%s304 + $0x78] sm:$0xff]
        %v412 = vand.u32 2147483647, %v396
        %v413 = vand.u32 2147483647, %v397
        %v414 = vand.u32 2147483647, %v398
        %v415 = vand.u32 2147483647, %v399
        %v416 = vand.u32 2147483647, %v400
        %v417 = vand.u32 2147483647, %v401
        %v418 = vand.u32 2147483647, %v402
        %v419 = vand.u32 2147483647, %v403
        %v420 = vand.u32 2147483647, %v404
        %v421 = vand.u32 2147483647, %v405
        %v422 = vand.u32 2147483647, %v406
        %v423 = vand.u32 2147483647, %v407
        %v424 = vand.u32 2147483647, %v408
        %v425 = vand.u32 2147483647, %v409
        %v426 = vand.u32 2147483647, %v410
        %v427 = vand.u32 2147483647, %v411
        %v428 = vmax.f32 %v412, %v413
        %429 = vmax.xlane.f32.xlu0 %v428
        %v430 = vpop.xlane.xlu0 %429
        %v431 = vmax.f32 %v414, %v415
        %432 = vmax.xlane.f32.xlu0 %v431
        %v433 = vpop.xlane.xlu0 %432
        %v434 = vmax.f32 %v416, %v417
        %435 = vmax.xlane.f32.xlu0 %v434
        %v436 = vpop.xlane.xlu0 %435
        %v437 = vmax.f32 %v418, %v419
        %438 = vmax.xlane.f32.xlu0 %v437
        %v439 = vpop.xlane.xlu0 %438
        %v440 = vmax.f32 %v420, %v421
        %441 = vmax.xlane.f32.xlu0 %v440
        %v442 = vpop.xlane.xlu0 %441
        %v443 = vmax.f32 %v422, %v423
        %444 = vmax.xlane.f32.xlu0 %v443
        %v445 = vpop.xlane.xlu0 %444
        %v446 = vmax.f32 %v424, %v425
        %447 = vmax.xlane.f32.xlu0 %v446
        %v448 = vpop.xlane.xlu0 %447
        %v449 = vmax.f32 %v426, %v427
        %450 = vmax.xlane.f32.xlu0 %v449
        %v451 = vpop.xlane.xlu0 %450
        %v452 = vmax.f32 %v430, 1e-30
        %v453 = vmax.f32 %v433, 1e-30
        %v454 = vmax.f32 %v436, 1e-30
        %v455 = vmax.f32 %v439, 1e-30
        %v456 = vmax.f32 %v442, 1e-30
        %v457 = vmax.f32 %v445, 1e-30
        %v458 = vmax.f32 %v448, 1e-30
        %v459 = vmax.f32 %v451, 1e-30
        %v460 = vmul.f32 %v452, 0.007874016
        %v461 = vmul.f32 %v453, 0.007874016
        %v462 = vmul.f32 %v454, 0.007874016
        %v463 = vmul.f32 %v455, 0.007874016
        %v464 = vmul.f32 %v456, 0.007874016
        %v465 = vmul.f32 %v457, 0.007874016
        %v466 = vmul.f32 %v458, 0.007874016
        %v467 = vmul.f32 %v459, 0.007874016
        %v468 = vrcp.pop %v460
        %v469 = vmul.f32 %v460, %v468
        %v470 = vsub.f32 1.0, %v469
        %v471 = vmul.f32 %v468, %v470
        %v472 = vadd.f32 %v468, %v471
        %vm473 = vweird.f32 %v460
        %vm474 = vweird.f32 %v468
        %vm475 = vmor %vm473, %vm474
        %v476 = vsel %vm475, %v468, %v472
        %v477 = vand.u32 2147483647, %v460
        %vm478 = vcmp.eq.f32.partialorder %v477, 8.507059e+37
        %v479 = vand.u32 %v460, 2147483648
        %v480 = vor.u32 1.1754944e-38, %v479
        %v481 = vsel %vm478, %v480, %v476
        %v482 = vmul.f32 1.0, %v481
        %v483 = vrcp.pop %v461
        %v484 = vmul.f32 %v461, %v483
        %v485 = vsub.f32 1.0, %v484
        %v486 = vmul.f32 %v483, %v485
        %v487 = vadd.f32 %v483, %v486
        %vm488 = vweird.f32 %v461
        %vm489 = vweird.f32 %v483
        %vm490 = vmor %vm488, %vm489
        %v491 = vsel %vm490, %v483, %v487
        %v492 = vand.u32 2147483647, %v461
        %vm493 = vcmp.eq.f32.partialorder %v492, 8.507059e+37
        %v494 = vand.u32 %v461, 2147483648
        %v495 = vor.u32 1.1754944e-38, %v494
        %v496 = vsel %vm493, %v495, %v491
        %v497 = vmul.f32 1.0, %v496
        %v498 = vrcp.pop %v462
        %v499 = vmul.f32 %v462, %v498
        %v500 = vsub.f32 1.0, %v499
        %v501 = vmul.f32 %v498, %v500
        %v502 = vadd.f32 %v498, %v501
        %vm503 = vweird.f32 %v462
        %vm504 = vweird.f32 %v498
        %vm505 = vmor %vm503, %vm504
        %v506 = vsel %vm505, %v498, %v502
        %v507 = vand.u32 2147483647, %v462
        %vm508 = vcmp.eq.f32.partialorder %v507, 8.507059e+37
        %v509 = vand.u32 %v462, 2147483648
        %v510 = vor.u32 1.1754944e-38, %v509
        %v511 = vsel %vm508, %v510, %v506
        %v512 = vmul.f32 1.0, %v511
        %v513 = vrcp.pop %v463
        %v514 = vmul.f32 %v463, %v513
        %v515 = vsub.f32 1.0, %v514
        %v516 = vmul.f32 %v513, %v515
        %v517 = vadd.f32 %v513, %v516
        %vm518 = vweird.f32 %v463
        %vm519 = vweird.f32 %v513
        %vm520 = vmor %vm518, %vm519
        %v521 = vsel %vm520, %v513, %v517
        %v522 = vand.u32 2147483647, %v463
        %vm523 = vcmp.eq.f32.partialorder %v522, 8.507059e+37
        %v524 = vand.u32 %v463, 2147483648
        %v525 = vor.u32 1.1754944e-38, %v524
        %v526 = vsel %vm523, %v525, %v521
        %v527 = vmul.f32 1.0, %v526
        %v528 = vrcp.pop %v464
        %v529 = vmul.f32 %v464, %v528
        %v530 = vsub.f32 1.0, %v529
        %v531 = vmul.f32 %v528, %v530
        %v532 = vadd.f32 %v528, %v531
        %vm533 = vweird.f32 %v464
        %vm534 = vweird.f32 %v528
        %vm535 = vmor %vm533, %vm534
        %v536 = vsel %vm535, %v528, %v532
        %v537 = vand.u32 2147483647, %v464
        %vm538 = vcmp.eq.f32.partialorder %v537, 8.507059e+37
        %v539 = vand.u32 %v464, 2147483648
        %v540 = vor.u32 1.1754944e-38, %v539
        %v541 = vsel %vm538, %v540, %v536
        %v542 = vmul.f32 1.0, %v541
        %v543 = vrcp.pop %v465
        %v544 = vmul.f32 %v465, %v543
        %v545 = vsub.f32 1.0, %v544
        %v546 = vmul.f32 %v543, %v545
        %v547 = vadd.f32 %v543, %v546
        %vm548 = vweird.f32 %v465
        %vm549 = vweird.f32 %v543
        %vm550 = vmor %vm548, %vm549
        %v551 = vsel %vm550, %v543, %v547
        %v552 = vand.u32 2147483647, %v465
        %vm553 = vcmp.eq.f32.partialorder %v552, 8.507059e+37
        %v554 = vand.u32 %v465, 2147483648
        %v555 = vor.u32 1.1754944e-38, %v554
        %v556 = vsel %vm553, %v555, %v551
        %v557 = vmul.f32 1.0, %v556
        %v558 = vrcp.pop %v466
        %v559 = vmul.f32 %v466, %v558
        %v560 = vsub.f32 1.0, %v559
        %v561 = vmul.f32 %v558, %v560
        %v562 = vadd.f32 %v558, %v561
        %vm563 = vweird.f32 %v466
        %vm564 = vweird.f32 %v558
        %vm565 = vmor %vm563, %vm564
        %v566 = vsel %vm565, %v558, %v562
        %v567 = vand.u32 2147483647, %v466
        %vm568 = vcmp.eq.f32.partialorder %v567, 8.507059e+37
        %v569 = vand.u32 %v466, 2147483648
        %v570 = vor.u32 1.1754944e-38, %v569
        %v571 = vsel %vm568, %v570, %v566
        %v572 = vmul.f32 1.0, %v571
        %v573 = vrcp.pop %v467
        %v574 = vmul.f32 %v467, %v573
        %v575 = vsub.f32 1.0, %v574
        %v576 = vmul.f32 %v573, %v575
        %v577 = vadd.f32 %v573, %v576
        %vm578 = vweird.f32 %v467
        %vm579 = vweird.f32 %v573
        %vm580 = vmor %vm578, %vm579
        %v581 = vsel %vm580, %v573, %v577
        %v582 = vand.u32 2147483647, %v467
        %vm583 = vcmp.eq.f32.partialorder %v582, 8.507059e+37
        %v584 = vand.u32 %v467, 2147483648
        %v585 = vor.u32 1.1754944e-38, %v584
        %v586 = vsel %vm583, %v585, %v581
        %v587 = vmul.f32 1.0, %v586
        %v588 = vmul.f32 %v396, %v482
        %v589 = vmul.f32 %v397, %v482
        %v590 = vmul.f32 %v398, %v497
        %v591 = vmul.f32 %v399, %v497
        %v592 = vmul.f32 %v400, %v512
        %v593 = vmul.f32 %v401, %v512
        %v594 = vmul.f32 %v402, %v527
        %v595 = vmul.f32 %v403, %v527
        %v596 = vmul.f32 %v404, %v542
        %v597 = vmul.f32 %v405, %v542
        %v598 = vmul.f32 %v406, %v557
        %v599 = vmul.f32 %v407, %v557
        %v600 = vmul.f32 %v408, %v572
        %v601 = vmul.f32 %v409, %v572
        %v602 = vmul.f32 %v410, %v587
        %v603 = vmul.f32 %v411, %v587
        %v604 = vround.ne.pseudo %v588
        %v605 = vround.ne.pseudo %v589
        %v606 = vround.ne.pseudo %v590
        %v607 = vround.ne.pseudo %v591
        %v608 = vround.ne.pseudo %v592
        %v609 = vround.ne.pseudo %v593
        %v610 = vround.ne.pseudo %v594
        %v611 = vround.ne.pseudo %v595
        %v612 = vround.ne.pseudo %v596
        %v613 = vround.ne.pseudo %v597
        %v614 = vround.ne.pseudo %v598
        %v615 = vround.ne.pseudo %v599
        %v616 = vround.ne.pseudo %v600
        %v617 = vround.ne.pseudo %v601
        %v618 = vround.ne.pseudo %v602
        %v619 = vround.ne.pseudo %v603
        %v620 = vmax.f32 %v604, -128.0
        %v621 = vmax.f32 %v605, -128.0
        %v622 = vmax.f32 %v606, -128.0
        %v623 = vmax.f32 %v607, -128.0
        %v624 = vmax.f32 %v608, -128.0
        %v625 = vmax.f32 %v609, -128.0
        %v626 = vmax.f32 %v610, -128.0
        %v627 = vmax.f32 %v611, -128.0
        %v628 = vmax.f32 %v612, -128.0
        %v629 = vmax.f32 %v613, -128.0
        %v630 = vmax.f32 %v614, -128.0
        %v631 = vmax.f32 %v615, -128.0
        %v632 = vmax.f32 %v616, -128.0
        %v633 = vmax.f32 %v617, -128.0
        %v634 = vmax.f32 %v618, -128.0
        %v635 = vmax.f32 %v619, -128.0
        %v636 = vmin.f32 %v620, 127.0
        %v637 = vmin.f32 %v621, 127.0
        %v638 = vmin.f32 %v622, 127.0
        %v639 = vmin.f32 %v623, 127.0
        %v640 = vmin.f32 %v624, 127.0
        %v641 = vmin.f32 %v625, 127.0
        %v642 = vmin.f32 %v626, 127.0
        %v643 = vmin.f32 %v627, 127.0
        %v644 = vmin.f32 %v628, 127.0
        %v645 = vmin.f32 %v629, 127.0
        %v646 = vmin.f32 %v630, 127.0
        %v647 = vmin.f32 %v631, 127.0
        %v648 = vmin.f32 %v632, 127.0
        %v649 = vmin.f32 %v633, 127.0
        %v650 = vmin.f32 %v634, 127.0
        %v651 = vmin.f32 %v635, 127.0
        %v652 = vcvt.f32.s32.to.zero.pseudo %v636
        %v653 = vcvt.f32.s32.to.zero.pseudo %v637
        %v654 = vcvt.f32.s32.to.zero.pseudo %v638
        %v655 = vcvt.f32.s32.to.zero.pseudo %v639
        %v656 = vcvt.f32.s32.to.zero.pseudo %v640
        %v657 = vcvt.f32.s32.to.zero.pseudo %v641
        %v658 = vcvt.f32.s32.to.zero.pseudo %v642
        %v659 = vcvt.f32.s32.to.zero.pseudo %v643
        %v660 = vcvt.f32.s32.to.zero.pseudo %v644
        %v661 = vcvt.f32.s32.to.zero.pseudo %v645
        %v662 = vcvt.f32.s32.to.zero.pseudo %v646
        %v663 = vcvt.f32.s32.to.zero.pseudo %v647
        %v664 = vcvt.f32.s32.to.zero.pseudo %v648
        %v665 = vcvt.f32.s32.to.zero.pseudo %v649
        %v666 = vcvt.f32.s32.to.zero.pseudo %v650
        %v667 = vcvt.f32.s32.to.zero.pseudo %v651
        %v668 = vpack.c.b16 %v654, %v652
        %v669 = vpack.c.b16 %v658, %v656
        %v670 = vpack.c.b8 %v669, %v668
        %v671 = vpack.c.b16 %v655, %v653
        %v672 = vpack.c.b16 %v659, %v657
        %v673 = vpack.c.b8 %v672, %v671
        %v674 = vpack.c.b16 %v662, %v660
        %v675 = vpack.c.b16 %v666, %v664
        %v676 = vpack.c.b8 %v675, %v674
        %v677 = vpack.c.b16 %v663, %v661
        %v678 = vpack.c.b16 %v667, %v665
        %v679 = vpack.c.b8 %v678, %v677
        %680 = vst [vmem:[%s327] sm:$0xff] %v670
        %681 = vst [vmem:[%s327 + $0x8] sm:$0xff] %v673
        %682 = vst [vmem:[%s327 + $0x10] sm:$0xff] %v676
        %683 = vst [vmem:[%s327 + $0x18] sm:$0xff] %v679
        %vm684 = vcmask 7168
        %685 = vst.msk [vmem:[%s369] sm:$0xff] %vm684, %v460
        %686 = vst.msk [vmem:[%s369 + $0x8] sm:$0xff] %vm684, %v461
        %687 = vst.msk [vmem:[%s369 + $0x10] sm:$0xff] %vm684, %v462
        %688 = vst.msk [vmem:[%s369 + $0x18] sm:$0xff] %vm684, %v463
        %689 = vst.msk [vmem:[%s369 + $0x20] sm:$0xff] %vm684, %v464
        %690 = vst.msk [vmem:[%s369 + $0x28] sm:$0xff] %vm684, %v465
        %691 = vst.msk [vmem:[%s369 + $0x30] sm:$0xff] %vm684, %v466
        %692 = vst.msk [vmem:[%s369 + $0x38] sm:$0xff] %vm684, %v467
        %v693 = vpack.c.bf16 %v398, %v396
        %v694 = vpack.c.bf16 %v399, %v397
        %v695 = vpack.c.bf16 %v402, %v400
        %v696 = vpack.c.bf16 %v403, %v401
        %v697 = vpack.c.bf16 %v406, %v404
        %v698 = vpack.c.bf16 %v407, %v405
        %v699 = vpack.c.bf16 %v410, %v408
        %v700 = vpack.c.bf16 %v411, %v409
        %v701 = vld [vmem:[%s1] sm:$0xf]
        %v702 = vld [vmem:[%s1 + $0x4] sm:$0xf]
        %v703 = vld [vmem:[%s1 + $0x8] sm:$0xf]
        %v704 = vld [vmem:[%s1 + $0xc] sm:$0xf]
        %v705 = vld [vmem:[%s1 + $0x10] sm:$0xf]
        %v706 = vld [vmem:[%s1 + $0x14] sm:$0xf]
        %v707 = vld [vmem:[%s1 + $0x18] sm:$0xf]
        %v708 = vld [vmem:[%s1 + $0x1c] sm:$0xf]
        %v709 = vld [vmem:[%s1 + $0x20] sm:$0xf]
        %v710 = vld [vmem:[%s1 + $0x24] sm:$0xf]
        %v711 = vld [vmem:[%s1 + $0x28] sm:$0xf]
        %v712 = vld [vmem:[%s1 + $0x2c] sm:$0xf]
        %v713 = vld [vmem:[%s1 + $0x30] sm:$0xf]
        %v714 = vld [vmem:[%s1 + $0x34] sm:$0xf]
        %v715 = vld [vmem:[%s1 + $0x38] sm:$0xf]
        %v716 = vld [vmem:[%s1 + $0x3c] sm:$0xf]
        %v717 = vld [vmem:[%s1 + $0x40] sm:$0xf]
        %v718 = vld [vmem:[%s1 + $0x44] sm:$0xf]
        %v719 = vld [vmem:[%s1 + $0x48] sm:$0xf]
        %v720 = vld [vmem:[%s1 + $0x4c] sm:$0xf]
        %v721 = vld [vmem:[%s1 + $0x50] sm:$0xf]
        %v722 = vld [vmem:[%s1 + $0x54] sm:$0xf]
        %v723 = vld [vmem:[%s1 + $0x58] sm:$0xf]
        %v724 = vld [vmem:[%s1 + $0x5c] sm:$0xf]
        %v725 = vld [vmem:[%s1 + $0x60] sm:$0xf]
        %v726 = vld [vmem:[%s1 + $0x64] sm:$0xf]
        %v727 = vld [vmem:[%s1 + $0x68] sm:$0xf]
        %v728 = vld [vmem:[%s1 + $0x6c] sm:$0xf]
        %v729 = vld [vmem:[%s1 + $0x70] sm:$0xf]
        %v730 = vld [vmem:[%s1 + $0x74] sm:$0xf]
        %v731 = vld [vmem:[%s1 + $0x78] sm:$0xf]
        %v732 = vld [vmem:[%s1 + $0x7c] sm:$0xf]
        %v765 = vunpack.c.l.b16 %v701
        %v766 = vunpack.c.l.b16 %v702
        %v767 = vunpack.c.l.b16 %v703
        %v768 = vunpack.c.l.b16 %v704
        %v769 = vunpack.c.l.b16 %v705
        %v770 = vunpack.c.l.b16 %v706
        %v771 = vunpack.c.l.b16 %v707
        %v772 = vunpack.c.l.b16 %v708
        %v773 = vunpack.c.l.b16 %v709
        %v774 = vunpack.c.l.b16 %v710
        %v775 = vunpack.c.l.b16 %v711
        %v776 = vunpack.c.l.b16 %v712
        %v777 = vunpack.c.l.b16 %v713
        %v778 = vunpack.c.l.b16 %v714
        %v779 = vunpack.c.l.b16 %v715
        %v780 = vunpack.c.l.b16 %v716
        %v781 = vunpack.c.l.b16 %v717
        %v782 = vunpack.c.l.b16 %v718
        %v783 = vunpack.c.l.b16 %v719
        %v784 = vunpack.c.l.b16 %v720
        %v785 = vunpack.c.l.b16 %v721
        %v786 = vunpack.c.l.b16 %v722
        %v787 = vunpack.c.l.b16 %v723
        %v788 = vunpack.c.l.b16 %v724
        %v789 = vunpack.c.l.b16 %v725
        %v790 = vunpack.c.l.b16 %v726
        %v791 = vunpack.c.l.b16 %v727
        %v792 = vunpack.c.l.b16 %v728
        %v793 = vunpack.c.l.b16 %v729
        %v794 = vunpack.c.l.b16 %v730
        %v795 = vunpack.c.l.b16 %v731
        %v796 = vunpack.c.l.b16 %v732
        %v797 = vpack.c.b16 %v766, %v765
        %v798 = vpack.c.b16 %v768, %v767
        %v799 = vpack.c.b16 %v770, %v769
        %v800 = vpack.c.b16 %v772, %v771
        %v801 = vpack.c.b16 %v774, %v773
        %v802 = vpack.c.b16 %v776, %v775
        %v803 = vpack.c.b16 %v778, %v777
        %v804 = vpack.c.b16 %v780, %v779
        %v805 = vpack.c.b16 %v782, %v781
        %v806 = vpack.c.b16 %v784, %v783
        %v807 = vpack.c.b16 %v786, %v785
        %v808 = vpack.c.b16 %v788, %v787
        %v809 = vpack.c.b16 %v790, %v789
        %v810 = vpack.c.b16 %v792, %v791
        %v811 = vpack.c.b16 %v794, %v793
        %v812 = vpack.c.b16 %v796, %v795
        %829 = vmatpush.bf16.msra.mxu0 %v804
        %830 = vmatpush.bf16.msra.mxu0 %v803
        %831 = vmatpush.bf16.msra.mxu0 %v802
        %832 = vmatpush.bf16.msra.mxu0 %v801
        %833 = vmatpush.bf16.msra.mxu0 %v800
        %834 = vmatpush.bf16.msra.mxu0 %v799
        %835 = vmatpush.bf16.msra.mxu0 %v798
        %836 = vmatpush.bf16.msra.mxu0 %v797
        %837 = vmatmul.bf16.gmra.mxu0 %v693
        %v838 = vpop.f32.mrf.mxu0
        %v839 = vadd.f32 0.0, %v838
        %v840 = vpop.f32.mrf.mxu0
        %v841 = vadd.f32 0.0, %v840
        %842 = vmatmul.bf16.gmra.mxu0 %v695
        %v843 = vpop.f32.mrf.mxu0
        %v844 = vadd.f32 0.0, %v843
        %v845 = vpop.f32.mrf.mxu0
        %v846 = vadd.f32 0.0, %v845
        %847 = vmatmul.bf16.gmra.mxu0 %v697
        %v848 = vpop.f32.mrf.mxu0
        %v849 = vadd.f32 0.0, %v848
        %v850 = vpop.f32.mrf.mxu0
        %v851 = vadd.f32 0.0, %v850
        %852 = vmatmul.bf16.gmra.mxu0 %v699
        %v853 = vpop.f32.mrf.mxu0
        %v854 = vadd.f32 0.0, %v853
        %v855 = vpop.f32.mrf.mxu0
        %v856 = vadd.f32 0.0, %v855
        %857 = vdwg.mxu0
        %858 = vmatpush.bf16.msra.mxu0 %v812
        %859 = vmatpush.bf16.msra.mxu0 %v811
        %860 = vmatpush.bf16.msra.mxu0 %v810
        %861 = vmatpush.bf16.msra.mxu0 %v809
        %862 = vmatpush.bf16.msra.mxu0 %v808
        %863 = vmatpush.bf16.msra.mxu0 %v807
        %864 = vmatpush.bf16.msra.mxu0 %v806
        %865 = vmatpush.bf16.msra.mxu0 %v805
        %866 = vmatmul.bf16.gmra.mxu0 %v694
        %v867 = vpop.f32.mrf.mxu0
        %v868 = vadd.f32 %v839, %v867
        %v869 = vpop.f32.mrf.mxu0
        %v870 = vadd.f32 %v841, %v869
        %871 = vmatmul.bf16.gmra.mxu0 %v696
        %v872 = vpop.f32.mrf.mxu0
        %v873 = vadd.f32 %v844, %v872
        %v874 = vpop.f32.mrf.mxu0
        %v875 = vadd.f32 %v846, %v874
        %876 = vmatmul.bf16.gmra.mxu0 %v698
        %v877 = vpop.f32.mrf.mxu0
        %v878 = vadd.f32 %v849, %v877
        %v879 = vpop.f32.mrf.mxu0
        %v880 = vadd.f32 %v851, %v879
        %881 = vmatmul.bf16.gmra.mxu0 %v700
        %v882 = vpop.f32.mrf.mxu0
        %v883 = vadd.f32 %v854, %v882
        %v884 = vpop.f32.mrf.mxu0
        %v885 = vadd.f32 %v856, %v884
        %886 = vdwg.mxu0
        %v887 = vpack.c.bf16 %v870, %v868
        %v888 = vpack.c.bf16 %v875, %v873
        %v889 = vpack.c.bf16 %v880, %v878
        %v890 = vpack.c.bf16 %v885, %v883
        %v891 = vld [vmem:[%s2] sm:$0xf]
        %v892 = vld [vmem:[%s2 + $0x4] sm:$0xf]
        %v893 = vld [vmem:[%s2 + $0x8] sm:$0xf]
        %v894 = vld [vmem:[%s2 + $0xc] sm:$0xf]
        %v895 = vld [vmem:[%s2 + $0x10] sm:$0xf]
        %v896 = vld [vmem:[%s2 + $0x14] sm:$0xf]
        %v903 = vunpack.c.l.b16 %v891
        %v904 = vunpack.c.l.b16 %v892
        %v905 = vunpack.c.l.b16 %v893
        %v906 = vunpack.c.l.b16 %v894
        %v907 = vunpack.c.l.b16 %v895
        %v908 = vunpack.c.l.b16 %v896
        %v909 = vpack.c.b16 %v904, %v903
        %v910 = vpack.c.b16 %v906, %v905
        %v911 = vpack.c.b16 %v908, %v907
        %vm915 = vcmask 392192
        %v917 = vsel %vm915, %v887, 0
        %v920 = vsel %vm915, %v888, 0
        %v923 = vsel %vm915, %v889, 0
        %v926 = vsel %vm915, %v890, 0
        %928 = vmatpush.bf16.msra.mxu0 0
        %929 = vmatpush.bf16.msra.mxu0 0
        %930 = vmatpush.bf16.msra.mxu0 0
        %931 = vmatpush.bf16.msra.mxu0 0
        %932 = vmatpush.bf16.msra.mxu0 0
        %933 = vmatpush.bf16.msra.mxu0 %v911
        %934 = vmatpush.bf16.msra.mxu0 %v910
        %935 = vmatpush.bf16.msra.mxu0 %v909
        %936 = vmatmul.bf16.gmra.mxu0 %v917
        %v937 = vpop.f32.mrf.mxu0
        %v938 = vadd.f32 0.0, %v937
        %v939 = vpop.f32.mrf.mxu0
        %v940 = vadd.f32 0.0, %v939
        %941 = vmatmul.bf16.gmra.mxu0 %v920
        %v942 = vpop.f32.mrf.mxu0
        %v943 = vadd.f32 0.0, %v942
        %v944 = vpop.f32.mrf.mxu0
        %v945 = vadd.f32 0.0, %v944
        %946 = vmatmul.bf16.gmra.mxu0 %v923
        %v947 = vpop.f32.mrf.mxu0
        %v948 = vadd.f32 0.0, %v947
        %v949 = vpop.f32.mrf.mxu0
        %v950 = vadd.f32 0.0, %v949
        %951 = vmatmul.bf16.gmra.mxu0 %v926
        %v952 = vpop.f32.mrf.mxu0
        %v953 = vadd.f32 0.0, %v952
        %v954 = vpop.f32.mrf.mxu0
        %v955 = vadd.f32 0.0, %v954
        %956 = vdwg.mxu0
        %v957 = vpack.c.bf16 %v938, %v938
        %v958 = vpack.c.bf16 %v940, %v940
        %v959 = vpack.c.bf16 %v943, %v943
        %v960 = vpack.c.bf16 %v945, %v945
        %v961 = vpack.c.bf16 %v948, %v948
        %v962 = vpack.c.bf16 %v950, %v950
        %v963 = vpack.c.bf16 %v953, %v953
        %v964 = vpack.c.bf16 %v955, %v955
        %vm965 = vcmask 125952
        %966 = vst.msk [vmem:[%s375] sm:$0xf] %vm965, %v957
        %967 = vst.msk [vmem:[%s375 + $0x4] sm:$0xf] %vm965, %v958
        %968 = vst.msk [vmem:[%s375 + $0x8] sm:$0xf] %vm965, %v959
        %969 = vst.msk [vmem:[%s375 + $0xc] sm:$0xf] %vm965, %v960
        %970 = vst.msk [vmem:[%s375 + $0x10] sm:$0xf] %vm965, %v961
        %971 = vst.msk [vmem:[%s375 + $0x14] sm:$0xf] %vm965, %v962
        %972 = vst.msk [vmem:[%s375 + $0x18] sm:$0xf] %vm965, %v963
        %973 = vst.msk [vmem:[%s375 + $0x1c] sm:$0xf] %vm965, %v964
        %vm974 = vcmask 130048
        %975 = vst.msk [vmem:[%s381] sm:$0xff] %vm974, %v868
        %976 = vst.msk [vmem:[%s381 + $0x8] sm:$0xff] %vm974, %v870
        %977 = vst.msk [vmem:[%s381 + $0x10] sm:$0xff] %vm974, %v873
        %978 = vst.msk [vmem:[%s381 + $0x18] sm:$0xff] %vm974, %v875
        %979 = vst.msk [vmem:[%s381 + $0x20] sm:$0xff] %vm974, %v878
        %980 = vst.msk [vmem:[%s381 + $0x28] sm:$0xff] %vm974, %v880
        %981 = vst.msk [vmem:[%s381 + $0x30] sm:$0xff] %vm974, %v883
        %982 = vst.msk [vmem:[%s381 + $0x38] sm:$0xff] %vm974, %v885
        %991 = vrot.lane.b32.xlu0 %v868, 112
        %v992 = vpop.permute.xlu0 %991
        %993 = vrot.lane.b32.xlu0 %v870, 112
        %v994 = vpop.permute.xlu0 %993
        %995 = vrot.lane.b32.xlu0 %v873, 112
        %v996 = vpop.permute.xlu0 %995
        %997 = vrot.lane.b32.xlu0 %v875, 112
        %v998 = vpop.permute.xlu0 %997
        %999 = vrot.lane.b32.xlu0 %v878, 112
        %v1000 = vpop.permute.xlu0 %999
        %1001 = vrot.lane.b32.xlu0 %v880, 112
        %v1002 = vpop.permute.xlu0 %1001
        %1003 = vrot.lane.b32.xlu0 %v883, 112
        %v1004 = vpop.permute.xlu0 %1003
        %1005 = vrot.lane.b32.xlu0 %v885, 112
        %v1006 = vpop.permute.xlu0 %1005
        %1015 = vst.msk [vmem:[%s387] sm:$0xff] %vm974, %v992
        %1016 = vst.msk [vmem:[%s387 + $0x8] sm:$0xff] %vm974, %v994
        %1017 = vst.msk [vmem:[%s387 + $0x10] sm:$0xff] %vm974, %v996
        %1018 = vst.msk [vmem:[%s387 + $0x18] sm:$0xff] %vm974, %v998
        %1019 = vst.msk [vmem:[%s387 + $0x20] sm:$0xff] %vm974, %v1000
        %1020 = vst.msk [vmem:[%s387 + $0x28] sm:$0xff] %vm974, %v1002
        %1021 = vst.msk [vmem:[%s387 + $0x30] sm:$0xff] %vm974, %v1004
        %1022 = vst.msk [vmem:[%s387 + $0x38] sm:$0xff] %vm974, %v1006
        %1023 = vrot.lane.b32.xlu0 %v868, 96
        %v1024 = vpop.permute.xlu0 %1023
        %1025 = vrot.lane.b32.xlu0 %v870, 96
        %v1026 = vpop.permute.xlu0 %1025
        %1027 = vrot.lane.b32.xlu0 %v873, 96
        %v1028 = vpop.permute.xlu0 %1027
        %1029 = vrot.lane.b32.xlu0 %v875, 96
        %v1030 = vpop.permute.xlu0 %1029
        %1031 = vrot.lane.b32.xlu0 %v878, 96
        %v1032 = vpop.permute.xlu0 %1031
        %1033 = vrot.lane.b32.xlu0 %v880, 96
        %v1034 = vpop.permute.xlu0 %1033
        %1035 = vrot.lane.b32.xlu0 %v883, 96
        %v1036 = vpop.permute.xlu0 %1035
        %1037 = vrot.lane.b32.xlu0 %v885, 96
        %v1038 = vpop.permute.xlu0 %1037
        %1047 = vst.msk [vmem:[%s393] sm:$0xff] %vm974, %v1024
        %1048 = vst.msk [vmem:[%s393 + $0x8] sm:$0xff] %vm974, %v1026
        %1049 = vst.msk [vmem:[%s393 + $0x10] sm:$0xff] %vm974, %v1028
        %1050 = vst.msk [vmem:[%s393 + $0x18] sm:$0xff] %vm974, %v1030
        %1051 = vst.msk [vmem:[%s393 + $0x20] sm:$0xff] %vm974, %v1032
        %1052 = vst.msk [vmem:[%s393 + $0x28] sm:$0xff] %vm974, %v1034
        %1053 = vst.msk [vmem:[%s393 + $0x30] sm:$0xff] %vm974, %v1036
        %1054 = vst.msk [vmem:[%s393 + $0x38] sm:$0xff] %vm974, %v1038
        %s1055 = sand.u32 %s102, 1
        %s1056 = scalar_lea.sflag [#allocation4], %s1055
        %s1057 = sand.u32 %s102, 1
        %s1058 = smul.addr %s1057, 32
        %s1059 = scalar_lea.vmem [#allocation5], %s1058
        %s1060 = smul.u32 8, %s26
        %p1061 = scmp.lt.s32.totalorder %s1060, 31
        %s1062 = scalar_select %p1061, %s1060, 31
        %s1063 = smul.addr %s1062, 8
        %s1064 = scalar_lea.vmem %s4, %s1063
        %s1065 = smul.u32 8, %s26
        %p1066 = scmp.lt.s32.totalorder %s1065, 31
        %s1067 = scalar_select %p1066, %s1065, 31
        %s1068 = smul.addr %s1067, 4
        %s1069 = scalar_lea.vmem %s5, %s1068
        %s1070 = smul.u32 8, %s26
        %p1071 = scmp.lt.s32.totalorder %s1070, 31
        %s1072 = scalar_select %p1071, %s1070, 31
        %s1073 = smul.addr %s1072, 8
        %s1074 = scalar_lea.vmem %s6, %s1073
        %s1075 = smul.u32 8, %s26
        %p1076 = scmp.lt.s32.totalorder %s1075, 31
        %s1077 = scalar_select %p1076, %s1075, 31
        %s1078 = smul.addr %s1077, 8
        %s1079 = scalar_lea.vmem %s7, %s1078
        %s1080 = smul.u32 8, %s26
        %p1081 = scmp.lt.s32.totalorder %s1080, 31
        %s1082 = scalar_select %p1081, %s1080, 31
        %s1083 = smul.addr %s1082, 8
        %s1084 = scalar_lea.vmem %s8, %s1083
        // Predicated region
        $region37: #{tpu_custom_call.1} parent=31 // pred_check
          %p1085 = pneg %p112
        $region38: #{tpu_custom_call.1} parent=31 // pred_check_branch
          %1087 = sbr.rel (%p1085) target = $region40
        $region39: #{tpu_custom_call.1} parent=31 // pred_region
          %s1088 = smul.u32 2, %s26
          %1090 = vsyncadd %s1056, 0
          %s1091 = smul.addr %s1088, 2
          %s1092 = smul.addr %s1091, 8
          %s1093 = scalar_lea.hbm %s3, %s1092
          %s1094 = sshll.u32 %s1059, 4
          %s1095 = int_to_ptr.vmem [resolvable:$true] %s1094
          %s1096 = sshll.u32 %s1093, 4
          %s1097 = int_to_ptr.hbm [resolvable:$true] %s1096
          %1102 = dma.vmem_to_hbm [thread:$0]  %s1095, 512, %s1097, %s1056, 256, 256, 16
        $region40: #{tpu_custom_call.1} parent=31 // pred_fallthru
          _
        // Predicated region
        $region41: #{tpu_custom_call.1} parent=31 // pred_check
          %p1103 = pneg %p138
        $region42: #{tpu_custom_call.1} parent=31 // pred_check_branch
          %1105 = sbr.rel (%p1103) target = $region44
        $region43: #{tpu_custom_call.1} parent=31 // pred_region
          %s1106 = smul.u32 8, %s26
        $region44: #{tpu_custom_call.1} parent=31 // pred_fallthru
          _
        // Predicated region
        $region45: #{tpu_custom_call.1} parent=31 // pred_check
          %p1107 = pneg %p164
        $region46: #{tpu_custom_call.1} parent=31 // pred_check_branch
          %1109 = sbr.rel (%p1107) target = $region48
        $region47: #{tpu_custom_call.1} parent=31 // pred_region
          %s1110 = smul.u32 8, %s26
        $region48: #{tpu_custom_call.1} parent=31 // pred_fallthru
          _
        // Predicated region
        $region49: #{tpu_custom_call.1} parent=31 // pred_check
          %p1111 = pneg %p190
        $region50: #{tpu_custom_call.1} parent=31 // pred_check_branch
          %1113 = sbr.rel (%p1111) target = $region52
        $region51: #{tpu_custom_call.1} parent=31 // pred_region
          %s1114 = smul.u32 8, %s26
        $region52: #{tpu_custom_call.1} parent=31 // pred_fallthru
          _
        // Predicated region
        $region53: #{tpu_custom_call.1} parent=31 // pred_check
          %p1115 = pneg %p216
        $region54: #{tpu_custom_call.1} parent=31 // pred_check_branch
          %1117 = sbr.rel (%p1115) target = $region56
        $region55: #{tpu_custom_call.1} parent=31 // pred_region
          %s1118 = smul.u32 8, %s26
        $region56: #{tpu_custom_call.1} parent=31 // pred_fallthru
          _
        // Predicated region
        $region57: #{tpu_custom_call.1} parent=31 // pred_check
          %p1119 = pneg %p242
        $region58: #{tpu_custom_call.1} parent=31 // pred_check_branch
          %1121 = sbr.rel (%p1119) target = $region60
        $region59: #{tpu_custom_call.1} parent=31 // pred_region
          %s1122 = smul.u32 8, %s26
        $region60: #{tpu_custom_call.1} parent=31 // pred_fallthru
          _
      $region32: #{tpu_custom_call.1} parent=5 // pred_fallthru
        _
      %p1123 = scmp.le.s32.totalorder 2, %s21
      // Predicated region
      $region61: #{tpu_custom_call.1} parent=5 // pred_check
        %p1124 = pneg %p1123
      $region62: #{tpu_custom_call.1} parent=5 // pred_check_branch
        %1126 = sbr.rel (%p1124) target = $region64
      $region63: #{tpu_custom_call.1} parent=5 // pred_region
        %s1127 = ssub.s32 %s21, 2
        // Predicated region
        $region65: #{tpu_custom_call.1} parent=63 // pred_check
          %p1128 = pneg %p118
        $region66: #{tpu_custom_call.1} parent=63 // pred_check_branch
          %1130 = sbr.rel (%p1128) target = $region68
        $region67: #{tpu_custom_call.1} parent=63 // pred_region
          %s1131 = sand.u32 %s103, 1
          %s1132 = scalar_lea.sflag [#allocation4], %s1131
          %s1133 = sand.u32 %s103, 1
          %s1134 = smul.addr %s1133, 32
          %s1135 = scalar_lea.vmem [#allocation5], %s1134
          %1137 = dma.done %s1132, 512
        $region68: #{tpu_custom_call.1} parent=63 // pred_fallthru
          _
        // Predicated region
        $region69: #{tpu_custom_call.1} parent=63 // pred_check
          %p1138 = pneg %p144
        $region70: #{tpu_custom_call.1} parent=63 // pred_check_branch
          %1140 = sbr.rel (%p1138) target = $region72
        $region71: #{tpu_custom_call.1} parent=63 // pred_region
          %s1141 = smul.u32 8, %s27
          %p1142 = scmp.lt.s32.totalorder %s1141, 31
          %s1143 = scalar_select %p1142, %s1141, 31
          %s1144 = smul.addr %s1143, 8
          %s1145 = scalar_lea.vmem %s4, %s1144
        $region72: #{tpu_custom_call.1} parent=63 // pred_fallthru
          _
        // Predicated region
        $region73: #{tpu_custom_call.1} parent=63 // pred_check
          %p1146 = pneg %p170
        $region74: #{tpu_custom_call.1} parent=63 // pred_check_branch
          %1148 = sbr.rel (%p1146) target = $region76
        $region75: #{tpu_custom_call.1} parent=63 // pred_region
          %s1149 = smul.u32 8, %s27
          %p1150 = scmp.lt.s32.totalorder %s1149, 31
          %s1151 = scalar_select %p1150, %s1149, 31
          %s1152 = smul.addr %s1151, 4
          %s1153 = scalar_lea.vmem %s5, %s1152
        $region76: #{tpu_custom_call.1} parent=63 // pred_fallthru
          _
        // Predicated region
        $region77: #{tpu_custom_call.1} parent=63 // pred_check
          %p1154 = pneg %p196
        $region78: #{tpu_custom_call.1} parent=63 // pred_check_branch
          %1156 = sbr.rel (%p1154) target = $region80
        $region79: #{tpu_custom_call.1} parent=63 // pred_region
          %s1157 = smul.u32 8, %s27
          %p1158 = scmp.lt.s32.totalorder %s1157, 31
          %s1159 = scalar_select %p1158, %s1157, 31
          %s1160 = smul.addr %s1159, 8
          %s1161 = scalar_lea.vmem %s6, %s1160
        $region80: #{tpu_custom_call.1} parent=63 // pred_fallthru
          _
        // Predicated region
        $region81: #{tpu_custom_call.1} parent=63 // pred_check
          %p1162 = pneg %p222
        $region82: #{tpu_custom_call.1} parent=63 // pred_check_branch
          %1164 = sbr.rel (%p1162) target = $region84
        $region83: #{tpu_custom_call.1} parent=63 // pred_region
          %s1165 = smul.u32 8, %s27
          %p1166 = scmp.lt.s32.totalorder %s1165, 31
          %s1167 = scalar_select %p1166, %s1165, 31
          %s1168 = smul.addr %s1167, 8
          %s1169 = scalar_lea.vmem %s7, %s1168
        $region84: #{tpu_custom_call.1} parent=63 // pred_fallthru
          _
        // Predicated region
        $region85: #{tpu_custom_call.1} parent=63 // pred_check
          %p1170 = pneg %p248
        $region86: #{tpu_custom_call.1} parent=63 // pred_check_branch
          %1172 = sbr.rel (%p1170) target = $region88
        $region87: #{tpu_custom_call.1} parent=63 // pred_region
          %s1173 = smul.u32 8, %s27
          %p1174 = scmp.lt.s32.totalorder %s1173, 31
          %s1175 = scalar_select %p1174, %s1173, 31
          %s1176 = smul.addr %s1175, 8
          %s1177 = scalar_lea.vmem %s8, %s1176
        $region88: #{tpu_custom_call.1} parent=63 // pred_fallthru
          _
      $region64: #{tpu_custom_call.1} parent=5 // pred_fallthru
        _
    $region6: #{tpu_custom_call.1} parent=1 // loop_footer
      %s25 = sadd.s32 1, %s21
    $region7: #{tpu_custom_call.1} parent=1 // loop_footer_branch
      %20 = sbr.rel target = $region3
    $region8: #{tpu_custom_call.1} parent=1 // loop_exit
      _
    %1178 = vsyncpa [#allocation3], 1
    %s1179 = scalar_lea.sflag [#allocation3], 1
    %1180 = vsyncpa %s1179, 1
    %1181 = vsyncpa [#allocation4], 1
    %s1182 = scalar_lea.sflag [#allocation4], 1
    %1183 = vsyncpa %s1182, 1

</llo_original>
